<compile_context>
chip_gen: v7x
topology: tpu7x:2x2x1
jax: 0.10.0
libtpu: 0.0.40
codegen_flags: <defaults>
</compile_context>

<pallas_src>
import jax
import jax.numpy as jnp
from jax.experimental import pallas as pl
from jax.experimental.pallas import tpu as pltpu


def _forward_identity(y, num_atoms):
    # TODO(synk): BaseController._forward raises NotImplementedError in the
    # reference (abstract); identity is used so the base-class forward
    # (the repeat_interleave path) is exercised exactly.
    del num_atoms
    return y


def _expand_rows_kernel(starts_ref, ends_ref, y_ref, out_ref):
    """out[n, :] = y[g, :] where starts[g] <= global_row(n) < ends[g].

    starts_ref : (1, B_pad) int32   exclusive cumsum of num_atoms (VMEM, resident)
    ends_ref   : (1, B_pad) int32   inclusive cumsum of num_atoms (VMEM, resident)
    y_ref      : (B_pad, D_pad)     full per-graph table, resident in VMEM
    out_ref    : (TILE_N, D_pad)    per-atom output tile (lane-dense)
    """
    tile_n = out_ref.shape[0]
    b_pad = y_ref.shape[0]

    row0 = pl.program_id(0) * tile_n
    row_id = row0 + jax.lax.broadcasted_iota(jnp.int32, (tile_n, b_pad), 0)

    starts = starts_ref[...]                       # (1, B_pad), broadcasts over rows
    ends = ends_ref[...]                           # (1, B_pad)
    onehot = jnp.logical_and(row_id >= starts, row_id < ends).astype(y_ref.dtype)

    # One-hot row selection via the MXU: exact (0/1 weights, f32 accumulation),
    # fully vectorized, keeps output stores lane+sublane dense.
    # TODO(synk): for very large graph counts B, switch to a scalar-prefetch
    # windowed one-hot (fixed-width W ~ 16-32 per tile) so cost is independent
    # of B and the y table can stream instead of staying fully resident.
    out_ref[...] = jnp.dot(
        onehot, y_ref[...], preferred_element_type=jnp.float32
    ).astype(out_ref.dtype)


def _pick_tile_n(d_pad, itemsize, b_pad, total_rows, sublane):
    """Choose the output tile height (rows per grid step).

    Targets a multi-MiB output tile (measured: ~85% of HBM roofline at 1-2 MiB
    vs ~63% at 256 KiB) while keeping 2x out buffers + resident y table +
    one-hot / iota / f32-acc intermediates under a budget that fits every
    generation, including v7x's 64 MiB-per-TensorCore VMEM.
    """
    b_lane = max(int(pl.cdiv(b_pad, 128)) * 128, 128)
    budget = 40 * 1024 * 1024
    table_bytes = b_pad * d_pad * itemsize
    # Per output row: double-buffered out tile + iota/one-hot/f32-acc intermediates.
    per_row = 2 * d_pad * itemsize + 4 * max(b_lane, d_pad) * 4
    tile_n = max((budget - table_bytes) // per_row, sublane)
    tile_n = min(tile_n, 4096)                     # diminishing returns past ~2-4 MiB

    rows_aligned = int(pl.cdiv(total_rows, sublane)) * sublane
    tile_n = min(tile_n, rows_aligned)             # never pad tiny problems up

    # v7x: keep >= 2 grid tiles so the "parallel" axis can shard across both
    # TensorCores, as long as each half-tile stays >= ~1 MiB.
    if rows_aligned * d_pad * itemsize >= 2 * (1 << 20):
        half = int(pl.cdiv(rows_aligned, 2 * sublane)) * sublane
        tile_n = min(tile_n, half)

    tile_n = max(sublane, (tile_n // sublane) * sublane)
    return int(tile_n)


def repeat_interleave_rows(y, num_atoms, *, total_rows, tile_n=None):
    """Pallas row expansion: out[i, :] = y[g, :] with g s.t. i falls in graph g's
    row interval, for i in [0, total_rows).  Equivalent to
    jnp.repeat(y, num_atoms, axis=0, total_repeat_length=total_rows)."""
    b, d = y.shape
    itemsize = jnp.dtype(y.dtype).itemsize
    # dtype-aware minimum sublane multiple: 8 (f32), 16 (bf16), 32 (int8/fp8).
    sublane = max(8, 32 // max(itemsize, 1))

    # Lane-dense output: pad D to a multiple of 128 (unmasked vst on every row).
    d_pad = max(int(pl.cdiv(d, 128)) * 128, 128)
    # dtype-aware sublane padding of the per-graph table.
    b_pad = max(int(pl.cdiv(b, sublane)) * sublane, sublane)

    if tile_n is None:
        tile_n = _pick_tile_n(d_pad, itemsize, b_pad, total_rows, sublane)

    padded_rows = int(pl.cdiv(total_rows, tile_n)) * tile_n
    num_tiles = padded_rows // tile_n

    if (b_pad != b) or (d_pad != d):
        y_pad = jnp.pad(y, ((0, b_pad - b), (0, d_pad - d)))
    else:
        y_pad = y

    # Graph row boundaries: row r belongs to graph g iff starts[g] <= r < ends[g].
    # Padded graph columns get an empty interval (start == end == 0) so they never
    # match; rows past sum(num_atoms) match nothing and produce zero rows.
    na = num_atoms.astype(jnp.int32)
    ends_core = jnp.cumsum(na)
    starts_core = ends_core - na
    starts = jnp.zeros((1, b_pad), jnp.int32).at[0, :b].set(starts_core)
    ends = jnp.zeros((1, b_pad), jnp.int32).at[0, :b].set(ends_core)

    # Explicit scoped-VMEM limit: double-buffered out tile, single-buffered y
    # table, sublane-padded boundary rows, and compute intermediates (+slack),
    # clamped below v7x's 64 MiB-per-TC physical VMEM.
    b_lane = max(int(pl.cdiv(b_pad, 128)) * 128, 128)
    vmem_limit = (
        2 * tile_n * d_pad * itemsize          # double-buffered output tile
        + b_pad * d_pad * itemsize             # resident y table (single buffer)
        + 2 * 8 * b_lane * 4                   # starts/ends (sublane-padded in VMEM)
        + 4 * tile_n * max(b_lane, d_pad) * 4  # iota / one-hot / f32-acc intermediates
        + (2 << 20)                            # headroom
    )
    vmem_limit = int(min(vmem_limit, 56 * 1024 * 1024))

    out = pl.pallas_call(
        _expand_rows_kernel,
        grid_spec=pl.GridSpec(
            grid=(num_tiles,),
            in_specs=[
                # Boundary rows: constant block index, single-buffered (resident).
                pl.BlockSpec((1, b_pad), lambda i: (0, 0),
                             pipeline_mode=pl.Buffered(buffer_count=1)),
                pl.BlockSpec((1, b_pad), lambda i: (0, 0),
                             pipeline_mode=pl.Buffered(buffer_count=1)),
                # Whole y table resident in VMEM, single-buffered (no re-DMA).
                pl.BlockSpec((b_pad, d_pad), lambda i: (0, 0),
                             pipeline_mode=pl.Buffered(buffer_count=1)),
            ],
            out_specs=pl.BlockSpec((tile_n, d_pad), lambda i: (i, 0)),
        ),
        out_shape=jax.ShapeDtypeStruct((padded_rows, d_pad), y.dtype),
        compiler_params=pltpu.CompilerParams(
            # Independent output tiles -> shard across v7x's two TensorCores.
            dimension_semantics=("parallel",),
            vmem_limit_bytes=vmem_limit,
        ),
    )(starts, ends, y_pad)

    return out[:total_rows, :d]


def base_controller_forward(y, num_atoms, total_rows):
    """JAX/Pallas equivalent of BaseController.forward.

    `total_rows` is a *static* Python int (e.g. a padded bucket >= sum(num_atoms))
    so there is no device->host readback and no per-shape recompile inside the
    forward.  Caller contract: total_rows >= sum(num_atoms); if the bucket is
    larger, trailing rows are zero padding (mask/slice downstream); if it were
    smaller the expansion would silently truncate (same as total_repeat_length).
    """
    y = _forward_identity(y, num_atoms)
    if y.shape[0] == num_atoms.shape[0]:
        y = repeat_interleave_rows(y, num_atoms, total_rows=total_rows)
    return y


if __name__ == "__main__":
    key = jax.random.PRNGKey(0)
    key0, key1 = jax.random.split(key)

    # Primary case: lane-aligned conditioning features.
    B = 4          # number of crystals / graphs
    D = 128        # conditioning feature dim
    num_atoms = jnp.array([3, 5, 2, 6], dtype=jnp.int32)   # per-graph atom counts
    total = 16     # static bucket; equals sum(num_atoms) here

    y = jax.random.normal(key0, (B, D), dtype=jnp.float32)

    fwd = jax.jit(base_controller_forward, static_argnums=(2,))
    out = jax.block_until_ready(fwd(y, num_atoms, total))

    ref = jnp.repeat(y, num_atoms, axis=0, total_repeat_length=total)
    assert out.shape == (total, D), out.shape
    assert jnp.allclose(out, ref), "mismatch vs reference repeat_interleave"

    # Second case: non-lane-aligned D exercises the D -> 128 padding path.
    B2, D2 = 3, 64
    num_atoms2 = jnp.array([2, 1, 4], dtype=jnp.int32)
    total2 = 7
    y2 = jax.random.normal(key1, (B2, D2), dtype=jnp.float32)
    out2 = jax.block_until_ready(fwd(y2, num_atoms2, total2))
    ref2 = jnp.repeat(y2, num_atoms2, axis=0, total_repeat_length=total2)
    assert out2.shape == (total2, D2), out2.shape
    assert jnp.allclose(out2, ref2), "mismatch vs reference (padded-D path)"

    print("KERNEL_OK")
</pallas_src>

<mosaic_0001>
module attributes {stable_mosaic.version = 11 : i64} {
  func.func @_expand_rows_kernel(%arg0: i32, %arg1: memref<1x8xi32, #tpu.memory_space<vmem>>, %arg2: memref<1x8xi32, #tpu.memory_space<vmem>>, %arg3: memref<8x128xf32, #tpu.memory_space<vmem>>, %arg4: memref<16x128xf32, #tpu.memory_space<vmem>>) attributes {dimension_semantics = [#tpu.dimension_semantics<parallel>], iteration_bounds = array<i64: 1>, scalar_prefetch = 0 : i64, scratch_operands = 0 : i64, tpu.core_type = #tpu.core_type<tc>, window_params = [{pipeline_mode = #tpu.pipeline_mode<synchronous>, transform_indices = @transform_0, window_bounds = array<i64: 1, 8>}, {pipeline_mode = #tpu.pipeline_mode<synchronous>, transform_indices = @transform_1, window_bounds = array<i64: 1, 8>}, {pipeline_mode = #tpu.pipeline_mode<synchronous>, transform_indices = @transform_2, window_bounds = array<i64: 8, 128>}, {transform_indices = @transform_3, window_bounds = array<i64: 16, 128>}]} {
    %c16_i32 = arith.constant 16 : i32
    %0 = arith.muli %arg0, %c16_i32 : i32
    %1 = tpu.iota {dimensions = array<i32: 0>} : vector<16x8xi32>
    %2 = vector.broadcast %0 : i32 to vector<16x8xi32>
    %3 = arith.addi %2, %1 : vector<16x8xi32>
    %c0 = arith.constant 0 : index
    %c0_0 = arith.constant 0 : index
    %4 = vector.load %arg1[%c0, %c0_0] : memref<1x8xi32, #tpu.memory_space<vmem>>, vector<1x8xi32>
    %c0_1 = arith.constant 0 : index
    %c0_2 = arith.constant 0 : index
    %5 = vector.load %arg2[%c0_1, %c0_2] : memref<1x8xi32, #tpu.memory_space<vmem>>, vector<1x8xi32>
    %6 = vector.broadcast %4 : vector<1x8xi32> to vector<16x8xi32>
    %7 = arith.cmpi sge, %3, %6 : vector<16x8xi32>
    %8 = vector.broadcast %5 : vector<1x8xi32> to vector<16x8xi32>
    %9 = arith.cmpi slt, %3, %8 : vector<16x8xi32>
    %10 = arith.andi %7, %9 : vector<16x8xi1>
    %11 = arith.extui %10 : vector<16x8xi1> to vector<16x8xi32>
    %12 = arith.sitofp %11 : vector<16x8xi32> to vector<16x8xf32>
    %c0_3 = arith.constant 0 : index
    %c0_4 = arith.constant 0 : index
    %13 = vector.load %arg3[%c0_3, %c0_4] : memref<8x128xf32, #tpu.memory_space<vmem>>, vector<8x128xf32>
    %cst = arith.constant dense<0.000000e+00> : vector<16x128xf32>
    %14 = tpu.matmul %12, %13, %cst {dimension_numbers = #tpu.dot_dimension_numbers<[1], [0], [0], [1], [0, 0, 1, 1], [], []>} : vector<16x8xf32>, vector<8x128xf32>, vector<16x128xf32> -> vector<16x128xf32>
    %c0_5 = arith.constant 0 : index
    %c0_6 = arith.constant 0 : index
    %15 = vector.load %arg4[%c0_5, %c0_6] : memref<16x128xf32, #tpu.memory_space<vmem>>, vector<16x128xf32>
    tpu.vector_store %arg4[%c0_5, %c0_6], %14 {strides = array<i32>} : memref<16x128xf32, #tpu.memory_space<vmem>>, vector<16x128xf32>,
    return
  }
  func.func @transform_0(%arg0: i32) -> (i32, i32) {
    %c0_i32 = arith.constant 0 : i32
    %c0_i32_0 = arith.constant 0 : i32
    %c0_i32_1 = arith.constant 0 : i32
    return %c0_i32, %c0_i32_0 : i32, i32
  }
  func.func @transform_1(%arg0: i32) -> (i32, i32) {
    %c0_i32 = arith.constant 0 : i32
    %c0_i32_0 = arith.constant 0 : i32
    %c0_i32_1 = arith.constant 0 : i32
    return %c0_i32, %c0_i32_0 : i32, i32
  }
  func.func @transform_2(%arg0: i32) -> (i32, i32) {
    %c0_i32 = arith.constant 0 : i32
    %c0_i32_0 = arith.constant 0 : i32
    %c0_i32_1 = arith.constant 0 : i32
    return %c0_i32, %c0_i32_0 : i32, i32
  }
  func.func @transform_3(%arg0: i32) -> (i32, i32) {
    %c0_i32 = arith.constant 0 : i32
    %c0_i32_0 = arith.constant 0 : i32
    return %arg0, %c0_i32 : i32, i32
  }
}

</mosaic_0001>

<llo_original>
// kernel: base_controller_forward.1
$region0: #{base_controller_forward.1}
  #allocation0 [shape = 'u32[]', space=smem, size = 0x4, offset = 0x4, fixed_abs, tag = 'smem constant byte address 0x4 - core index']
  #allocation1 [shape = 'u32[144,128]{1,0:T(1,128)}', space=vmem, size = 0x12000, scoped, tag = 'internal scratch']
  %s0 = inlined_call_operand.vmem [shape: s32[1,8], index: 0, kind: input, shape index: {}]
  %s1 = inlined_call_operand.vmem [shape: s32[1,8], index: 1, kind: input, shape index: {}]
  %s2 = inlined_call_operand.vmem [shape: f32[8,128], index: 2, kind: input, shape index: {}]
  %s3 = inlined_call_operand.hbm [shape: f32[16,128], index: 3, kind: output, shape index: {}]
  %s4 = sld [smem:[#allocation0]]
  $region22: #{base_controller_forward.1} parent=0
    _
  %s6 = ssub.s32 1, %s4
  %s7 = scalar_select 0, %s6, %s4
  $region1: #{base_controller_forward.1} parent=0
    #allocation2 [shape = 'u8[8192]{0}', space=vmem, size = 0x2000, scoped, tag = 'output window, operand 0, single buffered']
    #allocation3 [shape = 's32[1]{0}', space=sflag, size = 0x4, scoped, tag = 'scoped memory for base_controller_forward.1']
    %8 = vsyncpa [#allocation3], 0
    // Predicated region
    $region2: #{base_controller_forward.1} parent=1 // pred_check
      _
    $region3: #{base_controller_forward.1} parent=1 // pred_check_branch
      %10 = sbr.rel (0) target = $region5
    $region4: #{base_controller_forward.1} parent=1 // pred_region
      _
    $region5: #{base_controller_forward.1} parent=1 // pred_fallthru
      _
    // Predicated region
    $region6: #{base_controller_forward.1} parent=1 // pred_check
      _
    $region7: #{base_controller_forward.1} parent=1 // pred_check_branch
      %12 = sbr.rel (0) target = $region9
    $region8: #{base_controller_forward.1} parent=1 // pred_region
      _
    $region9: #{base_controller_forward.1} parent=1 // pred_fallthru
      _
    // Predicated region
    $region10: #{base_controller_forward.1} parent=1 // pred_check
      _
    $region11: #{base_controller_forward.1} parent=1 // pred_check_branch
      %14 = sbr.rel (0) target = $region13
    $region12: #{base_controller_forward.1} parent=1 // pred_region
      _
    $region13: #{base_controller_forward.1} parent=1 // pred_fallthru
      _
    %s15 = smul.u32 0, 16
    %v16 = vlaneseq
    %v17 = vshrl.u32 %v16, 7
    %v18 = vadd.s32 %v17, 8
    %v19 = vstv %s15
    %v20 = vadd.s32 %v19, %v17
    %v21 = vadd.s32 %v19, %v18
    %v22 = vld [vmem:[%s0] sm:$0x1]
    %v23 = vld [vmem:[%s1] sm:$0x1]
    %v24 = vlaneseq
    %v25 = vshrl.u32 %v24, 7
    %v26 = vsub.s32 0, %v25
    %v27 = vrot.slane %v22, %v26
    %vm28 = vcmp.ge.s32.totalorder %v20, %v27
    %vm29 = vcmp.ge.s32.totalorder %v21, %v27
    %v30 = vlaneseq
    %v31 = vshrl.u32 %v30, 7
    %v32 = vsub.s32 0, %v31
    %v33 = vrot.slane %v23, %v32
    %vm34 = vcmp.lt.s32.totalorder %v20, %v33
    %vm35 = vcmp.lt.s32.totalorder %v21, %v33
    %vm36 = vmand %vm28, %vm34
    %vm37 = vmand %vm29, %vm35
    %v38 = vsel %vm36, 1, 0
    %v39 = vsel %vm37, 1, 0
    %v40 = vcvt.s32.f32 %v38
    %v41 = vcvt.s32.f32 %v39
    %v42 = vld [vmem:[%s2] sm:$0xff]
    %vm43 = vcmask 64512
    %v45 = vsel %vm43, %v40, 0
    %v48 = vsel %vm43, %v41, 0
    %50 = vmatprep.subr.mxu0 0.0
    %51 = vmatpush1.msra.mxu0 %v42
    %52 = vmatprep.subr.mxu0 0.0
    %53 = vmatpush1.msra.mxu0 0.0
    %54 = vmatprep.subr.mxu0 0.0
    %55 = vmatpush1.msra.mxu0 0.0
    %56 = vmatprep.subr.mxu0 0.0
    %57 = vmatpush1.msra.mxu0 0.0
    %58 = vmatprep.subr.mxu0 0.0
    %59 = vmatpush1.msra.mxu0 0.0
    %60 = vmatprep.subr.mxu0 0.0
    %61 = vmatpush1.msra.mxu0 0.0
    %62 = vmatprep.subr.mxu0 0.0
    %63 = vmatpush1.msra.mxu0 0.0
    %64 = vmatprep.subr.mxu0 0.0
    %65 = vmatpush1.msra.mxu0 0.0
    %66 = vmatprep.subr.mxu0 0.0
    %67 = vmatpush1.msra.mxu0 0.0
    %68 = vmatprep.subr.mxu0 0.0
    %69 = vmatpush1.msra.mxu0 0.0
    %70 = vmatprep.subr.mxu0 0.0
    %71 = vmatpush1.msra.mxu0 0.0
    %72 = vmatprep.subr.mxu0 0.0
    %73 = vmatpush1.msra.mxu0 0.0
    %74 = vmatprep.subr.mxu0 0.0
    %75 = vmatpush1.msra.mxu0 0.0
    %76 = vmatprep.subr.mxu0 0.0
    %77 = vmatpush1.msra.mxu0 0.0
    %78 = vmatprep.subr.mxu0 0.0
    %79 = vmatpush1.msra.mxu0 0.0
    %80 = vmatprep.subr.mxu0 0.0
    %81 = vmatpush1.msra.mxu0 0.0
    %82 = vmatprep.subr.mxu0 0.0
    %83 = vmatpush1.msra.mxu0 0.0
    %84 = vmatprep.subr.mxu0 0.0
    %85 = vmatpush1.msra.mxu0 0.0
    %86 = vmatprep.subr.mxu0 0.0
    %87 = vmatpush1.msra.mxu0 0.0
    %88 = vmatprep.subr.mxu0 0.0
    %89 = vmatpush1.msra.mxu0 0.0
    %90 = vmatprep.subr.mxu0 0.0
    %91 = vmatpush1.msra.mxu0 0.0
    %92 = vmatprep.subr.mxu0 0.0
    %93 = vmatpush1.msra.mxu0 0.0
    %94 = vmatprep.subr.mxu0 0.0
    %95 = vmatpush1.msra.mxu0 0.0
    %96 = vmatprep.subr.mxu0 0.0
    %97 = vmatpush1.msra.mxu0 0.0
    %98 = vmatprep.subr.mxu0 0.0
    %99 = vmatpush1.msra.mxu0 0.0
    %100 = vmatprep.subr.mxu0 0.0
    %101 = vmatpush1.msra.mxu0 0.0
    %102 = vmatprep.subr.mxu0 0.0
    %103 = vmatpush1.msra.mxu0 0.0
    %104 = vmatprep.subr.mxu0 0.0
    %105 = vmatpush1.msra.mxu0 0.0
    %106 = vmatprep.subr.mxu0 0.0
    %107 = vmatpush1.msra.mxu0 0.0
    %108 = vmatprep.subr.mxu0 0.0
    %109 = vmatpush1.msra.mxu0 0.0
    %110 = vmatprep.subr.mxu0 0.0
    %111 = vmatpush1.msra.mxu0 0.0
    %112 = vmatprep.subr.mxu0 0.0
    %113 = vmatpush1.msra.mxu0 0.0
    %114 = vmatprep.mubr.f32.mxu0 0.0
    %115 = vmatmul.mubr.f32.gmra.mrb[0].mxu0 %v45
    %v116 = vpop.f32.mrb[0].mxu0
    %v117 = vadd.f32 0.0, %v116
    %v118 = vpop.f32.mrb[0].mxu0
    %119 = vmatprep.mubr.f32.mxu0 0.0
    %120 = vmatmul.mubr.f32.gmra.mrb[0].mxu0 %v48
    %v121 = vpop.f32.mrb[0].mxu0
    %v122 = vadd.f32 0.0, %v121
    %v123 = vpop.f32.mrb[0].mxu0
    %124 = vdwg.mxu0
    %125 = vst [vmem:[#allocation2] sm:$0xff] %v117
    %126 = vst [vmem:[#allocation2 + $0x8] sm:$0xff] %v122
    // Predicated region
    $region14: #{base_controller_forward.1} parent=1 // pred_check
      _
    $region15: #{base_controller_forward.1} parent=1 // pred_check_branch
      %128 = sbr.rel (0) target = $region17
    $region16: #{base_controller_forward.1} parent=1 // pred_region
      %s130 = ssub.s32 256, 256
      %131 = vsyncadd [#allocation3], %s130
      %s132 = sshll.u32 [#allocation2], 4
      %s133 = int_to_ptr.vmem [resolvable:$true] %s132
      %138 = dma.vmem_to_hbm [thread:$0]  %s133, 256, %s3, [#allocation3], 128, 128, 8
    $region17: #{base_controller_forward.1} parent=1 // pred_fallthru
      _
    // Predicated region
    $region18: #{base_controller_forward.1} parent=1 // pred_check
      _
    $region19: #{base_controller_forward.1} parent=1 // pred_check_branch
      %140 = sbr.rel (0) target = $region21
    $region20: #{base_controller_forward.1} parent=1 // pred_region
      %141 = dma.done [#allocation3], 256
    $region21: #{base_controller_forward.1} parent=1 // pred_fallthru
      _
    %142 = vsyncpa [#allocation3], 1

</llo_original>
